<compile_context>
chip_gen: v7x
topology: tpu7x:2x2x1
jax: 0.10.0
libtpu: 0.0.40
codegen_flags: <defaults>
</compile_context>

<pallas_src>
import jax
import jax.numpy as jnp
from jax.experimental import pallas as pl
from jax.experimental.pallas import tpu as pltpu


def _round_up(a, b):
    return (a + b - 1) // b * b


def _simple_nn_relu_kernel(x_ref, m1_ref, w1_ref, b1_ref, m2_ref,
                           w2_ref, b2_ref, w3_ref, b3_ref, w4_ref, b4_ref,
                           wh_ref, bh_ref, out_ref):
    f32 = jnp.float32
    # dropout1 (mask is 1.0 everywhere in eval mode)
    h = x_ref[...].astype(f32) * m1_ref[...].astype(f32)
    # fc1 + relu
    h = jnp.dot(h, w1_ref[...].astype(f32), preferred_element_type=f32) + b1_ref[...]
    h = jnp.maximum(h, 0.0)
    # dropout2
    h = h * m2_ref[...].astype(f32)
    # fc2 + relu
    h = jnp.dot(h, w2_ref[...].astype(f32), preferred_element_type=f32) + b2_ref[...]
    h = jnp.maximum(h, 0.0)
    # fc3 + relu
    h = jnp.dot(h, w3_ref[...].astype(f32), preferred_element_type=f32) + b3_ref[...]
    h = jnp.maximum(h, 0.0)
    # fc4 + relu
    h = jnp.dot(h, w4_ref[...].astype(f32), preferred_element_type=f32) + b4_ref[...]
    h = jnp.maximum(h, 0.0)
    # all classifier heads fused into one matmul (weights concatenated on axis 1)
    out = jnp.dot(h, wh_ref[...].astype(f32), preferred_element_type=f32) + bh_ref[...]
    out_ref[...] = out.astype(out_ref.dtype)


def simple_nn_relu_forward(x, params, out_dims, *, dropout_masks=None, max_tile_b=256):
    """JAX/Pallas equivalent of SimpleNN_relu.forward.

    params = (w1, b1, w2, b2, w3, b3, w4, b4, wh, bh) with weights stored
    (in_features, out_features) (i.e. the transpose of nn.Linear.weight);
    wh / bh are the per-head weights/biases concatenated along the class axis.
    dropout_masks: None for eval mode, or (m1, m2) inverted-dropout masks of
    shapes (B, in_dim) and (B, 50) for training mode.
    Returns a list of per-head outputs, one per entry of out_dims.
    """
    w1, b1, w2, b2, w3, b3, w4, b4, wh, bh = params
    B, in_dim = x.shape
    h1 = w1.shape[1]          # 50
    total = wh.shape[1]       # sum(out_dims)
    dtype = x.dtype

    # Batch tiling: tile rows are a multiple of 8 sublanes; grid is parallel.
    tile_b = min(max_tile_b, _round_up(B, 8))
    b_pad = _round_up(B, tile_b)

    if dropout_masks is None:
        m1 = jnp.ones((b_pad, in_dim), jnp.float32)
        m2 = jnp.ones((b_pad, h1), jnp.float32)
    else:
        m1, m2 = dropout_masks
        if b_pad != B:
            m1 = jnp.pad(m1, ((0, b_pad - B), (0, 0)))
            m2 = jnp.pad(m2, ((0, b_pad - B), (0, 0)))

    x_p = x if b_pad == B else jnp.pad(x, ((0, b_pad - B), (0, 0)))

    grid = (b_pad // tile_b,)

    out = pl.pallas_call(
        _simple_nn_relu_kernel,
        out_shape=jax.ShapeDtypeStruct((b_pad, total), dtype),
        grid=grid,
        in_specs=[
            pl.BlockSpec((tile_b, in_dim), lambda i: (i, 0)),   # x
            pl.BlockSpec((tile_b, in_dim), lambda i: (i, 0)),   # dropout mask 1
            pl.BlockSpec(w1.shape, lambda i: (0, 0)),           # fc1 weight
            pl.BlockSpec((1, h1), lambda i: (0, 0)),            # fc1 bias
            pl.BlockSpec((tile_b, h1), lambda i: (i, 0)),       # dropout mask 2
            pl.BlockSpec(w2.shape, lambda i: (0, 0)),           # fc2 weight
            pl.BlockSpec((1, w2.shape[1]), lambda i: (0, 0)),   # fc2 bias
            pl.BlockSpec(w3.shape, lambda i: (0, 0)),           # fc3 weight
            pl.BlockSpec((1, w3.shape[1]), lambda i: (0, 0)),   # fc3 bias
            pl.BlockSpec(w4.shape, lambda i: (0, 0)),           # fc4 weight
            pl.BlockSpec((1, w4.shape[1]), lambda i: (0, 0)),   # fc4 bias
            pl.BlockSpec(wh.shape, lambda i: (0, 0)),           # heads weight (concat)
            pl.BlockSpec((1, total), lambda i: (0, 0)),         # heads bias (concat)
        ],
        out_specs=pl.BlockSpec((tile_b, total), lambda i: (i, 0)),
        compiler_params=pltpu.CompilerParams(dimension_semantics=("parallel",)),
    )(x_p, m1, w1, b1.reshape(1, -1), m2, w2, b2.reshape(1, -1),
      w3, b3.reshape(1, -1), w4, b4.reshape(1, -1), wh, bh.reshape(1, -1))

    out = out[:B] if b_pad != B else out

    # Split the fused head output back into the per-head list.
    outs, off = [], 0
    for n in out_dims:
        outs.append(out[:, off:off + n])
        off += n
    return outs


def _ref_forward(x, params, out_dims, dropout_masks=None):
    """Pure-JAX reference of SimpleNN_relu.forward."""
    w1, b1, w2, b2, w3, b3, w4, b4, wh, bh = params
    h = x if dropout_masks is None else x * dropout_masks[0]
    h = jnp.maximum(h @ w1 + b1, 0.0)
    if dropout_masks is not None:
        h = h * dropout_masks[1]
    h = jnp.maximum(h @ w2 + b2, 0.0)
    h = jnp.maximum(h @ w3 + b3, 0.0)
    h = jnp.maximum(h @ w4 + b4, 0.0)
    out = h @ wh + bh
    outs, off = [], 0
    for n in out_dims:
        outs.append(out[:, off:off + n])
        off += n
    return outs


if __name__ == "__main__":
    key = jax.random.PRNGKey(0)
    B, in_dim = 8, 32
    out_dim = (3, 5)  # two classifier heads, matching the ModuleList in the spec

    ks = jax.random.split(key, 16)
    scale = 0.1
    w1 = scale * jax.random.normal(ks[0], (in_dim, 50), jnp.float32)
    b1 = scale * jax.random.normal(ks[1], (50,), jnp.float32)
    w2 = scale * jax.random.normal(ks[2], (50, 20), jnp.float32)
    b2 = scale * jax.random.normal(ks[3], (20,), jnp.float32)
    w3 = scale * jax.random.normal(ks[4], (20, 10), jnp.float32)
    b3 = scale * jax.random.normal(ks[5], (10,), jnp.float32)
    w4 = scale * jax.random.normal(ks[6], (10, 5), jnp.float32)
    b4 = scale * jax.random.normal(ks[7], (5,), jnp.float32)
    head_ws = [scale * jax.random.normal(ks[8 + i], (5, n), jnp.float32)
               for i, n in enumerate(out_dim)]
    head_bs = [scale * jax.random.normal(ks[10 + i], (n,), jnp.float32)
               for i, n in enumerate(out_dim)]
    wh = jnp.concatenate(head_ws, axis=1)
    bh = jnp.concatenate(head_bs, axis=0)
    params = (w1, b1, w2, b2, w3, b3, w4, b4, wh, bh)

    x = jax.random.normal(ks[12], (B, in_dim), jnp.float32)

    # --- Eval mode (dropout = identity) -------------------------------------
    outs = simple_nn_relu_forward(x, params, out_dim)
    outs = [jax.block_until_ready(o) for o in outs]
    refs = _ref_forward(x, params, out_dim)
    assert len(outs) == len(out_dim)
    for o, r, n in zip(outs, refs, out_dim):
        assert o.shape == (B, n) and o.dtype == x.dtype
        assert bool(jnp.allclose(o, r, atol=1e-4, rtol=1e-4))

    # --- Training mode (inverted dropout masks, generated outside the kernel) --
    k1, k2 = jax.random.split(ks[13])
    p1, p2 = 0.3, 0.1
    m1 = jax.random.bernoulli(k1, 1.0 - p1, (B, in_dim)).astype(jnp.float32) / (1.0 - p1)
    m2 = jax.random.bernoulli(k2, 1.0 - p2, (B, 50)).astype(jnp.float32) / (1.0 - p2)
    outs_t = simple_nn_relu_forward(x, params, out_dim, dropout_masks=(m1, m2))
    outs_t = [jax.block_until_ready(o) for o in outs_t]
    refs_t = _ref_forward(x, params, out_dim, dropout_masks=(m1, m2))
    for o, r, n in zip(outs_t, refs_t, out_dim):
        assert o.shape == (B, n)
        assert bool(jnp.allclose(o, r, atol=1e-4, rtol=1e-4))

    print("KERNEL_OK")
</pallas_src>

<mosaic_0001>
module attributes {stable_mosaic.version = 11 : i64} {
  func.func @_simple_nn_relu_kernel(%arg0: i32, %arg1: memref<8x32xf32, #tpu.memory_space<vmem>>, %arg2: memref<8x32xf32, #tpu.memory_space<vmem>>, %arg3: memref<32x50xf32, #tpu.memory_space<vmem>>, %arg4: memref<1x50xf32, #tpu.memory_space<vmem>>, %arg5: memref<8x50xf32, #tpu.memory_space<vmem>>, %arg6: memref<50x20xf32, #tpu.memory_space<vmem>>, %arg7: memref<1x20xf32, #tpu.memory_space<vmem>>, %arg8: memref<20x10xf32, #tpu.memory_space<vmem>>, %arg9: memref<1x10xf32, #tpu.memory_space<vmem>>, %arg10: memref<10x5xf32, #tpu.memory_space<vmem>>, %arg11: memref<1x5xf32, #tpu.memory_space<vmem>>, %arg12: memref<5x8xf32, #tpu.memory_space<vmem>>, %arg13: memref<1x8xf32, #tpu.memory_space<vmem>>, %arg14: memref<8x8xf32, #tpu.memory_space<vmem>>) attributes {dimension_semantics = [#tpu.dimension_semantics<parallel>], iteration_bounds = array<i64: 1>, scalar_prefetch = 0 : i64, scratch_operands = 0 : i64, tpu.core_type = #tpu.core_type<tc>, window_params = [{transform_indices = @transform_0, window_bounds = array<i64: 8, 32>}, {transform_indices = @transform_1, window_bounds = array<i64: 8, 32>}, {pipeline_mode = #tpu.pipeline_mode<synchronous>, transform_indices = @transform_2, window_bounds = array<i64: 32, 50>}, {pipeline_mode = #tpu.pipeline_mode<synchronous>, transform_indices = @transform_3, window_bounds = array<i64: 1, 50>}, {transform_indices = @transform_4, window_bounds = array<i64: 8, 50>}, {pipeline_mode = #tpu.pipeline_mode<synchronous>, transform_indices = @transform_5, window_bounds = array<i64: 50, 20>}, {pipeline_mode = #tpu.pipeline_mode<synchronous>, transform_indices = @transform_6, window_bounds = array<i64: 1, 20>}, {pipeline_mode = #tpu.pipeline_mode<synchronous>, transform_indices = @transform_7, window_bounds = array<i64: 20, 10>}, {pipeline_mode = #tpu.pipeline_mode<synchronous>, transform_indices = @transform_8, window_bounds = array<i64: 1, 10>}, {pipeline_mode = #tpu.pipeline_mode<synchronous>, transform_indices = @transform_9, window_bounds = array<i64: 10, 5>}, {pipeline_mode = #tpu.pipeline_mode<synchronous>, transform_indices = @transform_10, window_bounds = array<i64: 1, 5>}, {pipeline_mode = #tpu.pipeline_mode<synchronous>, transform_indices = @transform_11, window_bounds = array<i64: 5, 8>}, {pipeline_mode = #tpu.pipeline_mode<synchronous>, transform_indices = @transform_12, window_bounds = array<i64: 1, 8>}, {transform_indices = @transform_13, window_bounds = array<i64: 8, 8>}]} {
    %c0 = arith.constant 0 : index
    %c0_0 = arith.constant 0 : index
    %0 = vector.load %arg1[%c0, %c0_0] : memref<8x32xf32, #tpu.memory_space<vmem>>, vector<8x32xf32>
    %c0_1 = arith.constant 0 : index
    %c0_2 = arith.constant 0 : index
    %1 = vector.load %arg2[%c0_1, %c0_2] : memref<8x32xf32, #tpu.memory_space<vmem>>, vector<8x32xf32>
    %2 = arith.mulf %0, %1 : vector<8x32xf32>
    %c0_3 = arith.constant 0 : index
    %c0_4 = arith.constant 0 : index
    %3 = vector.load %arg3[%c0_3, %c0_4] : memref<32x50xf32, #tpu.memory_space<vmem>>, vector<32x50xf32>
    %cst = arith.constant dense<0.000000e+00> : vector<8x50xf32>
    %4 = tpu.matmul %2, %3, %cst {dimension_numbers = #tpu.dot_dimension_numbers<[1], [0], [0], [1], [0, 0, 1, 1], [], []>} : vector<8x32xf32>, vector<32x50xf32>, vector<8x50xf32> -> vector<8x50xf32>
    %c0_5 = arith.constant 0 : index
    %c0_6 = arith.constant 0 : index
    %5 = vector.load %arg4[%c0_5, %c0_6] : memref<1x50xf32, #tpu.memory_space<vmem>>, vector<1x50xf32>
    %6 = vector.broadcast %5 : vector<1x50xf32> to vector<8x50xf32>
    %7 = arith.addf %4, %6 : vector<8x50xf32>
    %cst_7 = arith.constant 0.000000e+00 : f32
    %8 = vector.broadcast %cst_7 : f32 to vector<8x50xf32>
    %9 = arith.maximumf %7, %8 : vector<8x50xf32>
    %c0_8 = arith.constant 0 : index
    %c0_9 = arith.constant 0 : index
    %10 = vector.load %arg5[%c0_8, %c0_9] : memref<8x50xf32, #tpu.memory_space<vmem>>, vector<8x50xf32>
    %11 = arith.mulf %9, %10 : vector<8x50xf32>
    %c0_10 = arith.constant 0 : index
    %c0_11 = arith.constant 0 : index
    %12 = vector.load %arg6[%c0_10, %c0_11] : memref<50x20xf32, #tpu.memory_space<vmem>>, vector<50x20xf32>
    %cst_12 = arith.constant dense<0.000000e+00> : vector<8x20xf32>
    %13 = tpu.matmul %11, %12, %cst_12 {dimension_numbers = #tpu.dot_dimension_numbers<[1], [0], [0], [1], [0, 0, 1, 1], [], []>} : vector<8x50xf32>, vector<50x20xf32>, vector<8x20xf32> -> vector<8x20xf32>
    %c0_13 = arith.constant 0 : index
    %c0_14 = arith.constant 0 : index
    %14 = vector.load %arg7[%c0_13, %c0_14] : memref<1x20xf32, #tpu.memory_space<vmem>>, vector<1x20xf32>
    %15 = vector.broadcast %14 : vector<1x20xf32> to vector<8x20xf32>
    %16 = arith.addf %13, %15 : vector<8x20xf32>
    %cst_15 = arith.constant 0.000000e+00 : f32
    %17 = vector.broadcast %cst_15 : f32 to vector<8x20xf32>
    %18 = arith.maximumf %16, %17 : vector<8x20xf32>
    %c0_16 = arith.constant 0 : index
    %c0_17 = arith.constant 0 : index
    %19 = vector.load %arg8[%c0_16, %c0_17] : memref<20x10xf32, #tpu.memory_space<vmem>>, vector<20x10xf32>
    %cst_18 = arith.constant dense<0.000000e+00> : vector<8x10xf32>
    %20 = tpu.matmul %18, %19, %cst_18 {dimension_numbers = #tpu.dot_dimension_numbers<[1], [0], [0], [1], [0, 0, 1, 1], [], []>} : vector<8x20xf32>, vector<20x10xf32>, vector<8x10xf32> -> vector<8x10xf32>
    %c0_19 = arith.constant 0 : index
    %c0_20 = arith.constant 0 : index
    %21 = vector.load %arg9[%c0_19, %c0_20] : memref<1x10xf32, #tpu.memory_space<vmem>>, vector<1x10xf32>
    %22 = vector.broadcast %21 : vector<1x10xf32> to vector<8x10xf32>
    %23 = arith.addf %20, %22 : vector<8x10xf32>
    %cst_21 = arith.constant 0.000000e+00 : f32
    %24 = vector.broadcast %cst_21 : f32 to vector<8x10xf32>
    %25 = arith.maximumf %23, %24 : vector<8x10xf32>
    %c0_22 = arith.constant 0 : index
    %c0_23 = arith.constant 0 : index
    %26 = vector.load %arg10[%c0_22, %c0_23] : memref<10x5xf32, #tpu.memory_space<vmem>>, vector<10x5xf32>
    %cst_24 = arith.constant dense<0.000000e+00> : vector<8x5xf32>
    %27 = tpu.matmul %25, %26, %cst_24 {dimension_numbers = #tpu.dot_dimension_numbers<[1], [0], [0], [1], [0, 0, 1, 1], [], []>} : vector<8x10xf32>, vector<10x5xf32>, vector<8x5xf32> -> vector<8x5xf32>
    %c0_25 = arith.constant 0 : index
    %c0_26 = arith.constant 0 : index
    %28 = vector.load %arg11[%c0_25, %c0_26] : memref<1x5xf32, #tpu.memory_space<vmem>>, vector<1x5xf32>
    %29 = vector.broadcast %28 : vector<1x5xf32> to vector<8x5xf32>
    %30 = arith.addf %27, %29 : vector<8x5xf32>
    %cst_27 = arith.constant 0.000000e+00 : f32
    %31 = vector.broadcast %cst_27 : f32 to vector<8x5xf32>
    %32 = arith.maximumf %30, %31 : vector<8x5xf32>
    %c0_28 = arith.constant 0 : index
    %c0_29 = arith.constant 0 : index
    %33 = vector.load %arg12[%c0_28, %c0_29] : memref<5x8xf32, #tpu.memory_space<vmem>>, vector<5x8xf32>
    %cst_30 = arith.constant dense<0.000000e+00> : vector<8x8xf32>
    %34 = tpu.matmul %32, %33, %cst_30 {dimension_numbers = #tpu.dot_dimension_numbers<[1], [0], [0], [1], [0, 0, 1, 1], [], []>} : vector<8x5xf32>, vector<5x8xf32>, vector<8x8xf32> -> vector<8x8xf32>
    %c0_31 = arith.constant 0 : index
    %c0_32 = arith.constant 0 : index
    %35 = vector.load %arg13[%c0_31, %c0_32] : memref<1x8xf32, #tpu.memory_space<vmem>>, vector<1x8xf32>
    %36 = vector.broadcast %35 : vector<1x8xf32> to vector<8x8xf32>
    %37 = arith.addf %34, %36 : vector<8x8xf32>
    %c0_33 = arith.constant 0 : index
    %c0_34 = arith.constant 0 : index
    %38 = vector.load %arg14[%c0_33, %c0_34] : memref<8x8xf32, #tpu.memory_space<vmem>>, vector<8x8xf32>
    tpu.vector_store %arg14[%c0_33, %c0_34], %37 {strides = array<i32>} : memref<8x8xf32, #tpu.memory_space<vmem>>, vector<8x8xf32>,
    return
  }
  func.func @transform_0(%arg0: i32) -> (i32, i32) {
    %c0_i32 = arith.constant 0 : i32
    %c0_i32_0 = arith.constant 0 : i32
    return %arg0, %c0_i32 : i32, i32
  }
  func.func @transform_1(%arg0: i32) -> (i32, i32) {
    %c0_i32 = arith.constant 0 : i32
    %c0_i32_0 = arith.constant 0 : i32
    return %arg0, %c0_i32 : i32, i32
  }
  func.func @transform_2(%arg0: i32) -> (i32, i32) {
    %c0_i32 = arith.constant 0 : i32
    %c0_i32_0 = arith.constant 0 : i32
    %c0_i32_1 = arith.constant 0 : i32
    return %c0_i32, %c0_i32_0 : i32, i32
  }
  func.func @transform_3(%arg0: i32) -> (i32, i32) {
    %c0_i32 = arith.constant 0 : i32
    %c0_i32_0 = arith.constant 0 : i32
    %c0_i32_1 = arith.constant 0 : i32
    return %c0_i32, %c0_i32_0 : i32, i32
  }
  func.func @transform_4(%arg0: i32) -> (i32, i32) {
    %c0_i32 = arith.constant 0 : i32
    %c0_i32_0 = arith.constant 0 : i32
    return %arg0, %c0_i32 : i32, i32
  }
  func.func @transform_5(%arg0: i32) -> (i32, i32) {
    %c0_i32 = arith.constant 0 : i32
    %c0_i32_0 = arith.constant 0 : i32
    %c0_i32_1 = arith.constant 0 : i32
    return %c0_i32, %c0_i32_0 : i32, i32
  }
  func.func @transform_6(%arg0: i32) -> (i32, i32) {
    %c0_i32 = arith.constant 0 : i32
    %c0_i32_0 = arith.constant 0 : i32
    %c0_i32_1 = arith.constant 0 : i32
    return %c0_i32, %c0_i32_0 : i32, i32
  }
  func.func @transform_7(%arg0: i32) -> (i32, i32) {
    %c0_i32 = arith.constant 0 : i32
    %c0_i32_0 = arith.constant 0 : i32
    %c0_i32_1 = arith.constant 0 : i32
    return %c0_i32, %c0_i32_0 : i32, i32
  }
  func.func @transform_8(%arg0: i32) -> (i32, i32) {
    %c0_i32 = arith.constant 0 : i32
    %c0_i32_0 = arith.constant 0 : i32
    %c0_i32_1 = arith.constant 0 : i32
    return %c0_i32, %c0_i32_0 : i32, i32
  }
  func.func @transform_9(%arg0: i32) -> (i32, i32) {
    %c0_i32 = arith.constant 0 : i32
    %c0_i32_0 = arith.constant 0 : i32
    %c0_i32_1 = arith.constant 0 : i32
    return %c0_i32, %c0_i32_0 : i32, i32
  }
  func.func @transform_10(%arg0: i32) -> (i32, i32) {
    %c0_i32 = arith.constant 0 : i32
    %c0_i32_0 = arith.constant 0 : i32
    %c0_i32_1 = arith.constant 0 : i32
    return %c0_i32, %c0_i32_0 : i32, i32
  }
  func.func @transform_11(%arg0: i32) -> (i32, i32) {
    %c0_i32 = arith.constant 0 : i32
    %c0_i32_0 = arith.constant 0 : i32
    %c0_i32_1 = arith.constant 0 : i32
    return %c0_i32, %c0_i32_0 : i32, i32
  }
  func.func @transform_12(%arg0: i32) -> (i32, i32) {
    %c0_i32 = arith.constant 0 : i32
    %c0_i32_0 = arith.constant 0 : i32
    %c0_i32_1 = arith.constant 0 : i32
    return %c0_i32, %c0_i32_0 : i32, i32
  }
  func.func @transform_13(%arg0: i32) -> (i32, i32) {
    %c0_i32 = arith.constant 0 : i32
    %c0_i32_0 = arith.constant 0 : i32
    return %arg0, %c0_i32 : i32, i32
  }
}

</mosaic_0001>

<llo_original>
// kernel: tpu_custom_call.1
$region0: #{tpu_custom_call.1}
  #allocation0 [shape = 'u32[]', space=smem, size = 0x4, offset = 0x4, fixed_abs, tag = 'smem constant byte address 0x4 - core index']
  #allocation1 [shape = 'u32[144,128]{1,0:T(1,128)}', space=vmem, size = 0x12000, scoped, tag = 'internal scratch']
  %s0 = inlined_call_operand.vmem [shape: f32[8,32], index: 0, kind: input, shape index: {}]
  %s1 = inlined_call_operand.vmem [shape: f32[8,32], index: 1, kind: input, shape index: {}]
  %s2 = inlined_call_operand.vmem [shape: f32[32,50], index: 2, kind: input, shape index: {}]
  %s3 = inlined_call_operand.vmem [shape: f32[1,50], index: 3, kind: input, shape index: {}]
  %s4 = inlined_call_operand.vmem [shape: f32[8,50], index: 4, kind: input, shape index: {}]
  %s5 = inlined_call_operand.vmem [shape: f32[50,20], index: 5, kind: input, shape index: {}]
  %s6 = inlined_call_operand.vmem [shape: f32[1,20], index: 6, kind: input, shape index: {}]
  %s7 = inlined_call_operand.vmem [shape: f32[20,10], index: 7, kind: input, shape index: {}]
  %s8 = inlined_call_operand.vmem [shape: f32[1,10], index: 8, kind: input, shape index: {}]
  %s9 = inlined_call_operand.vmem [shape: f32[10,5], index: 9, kind: input, shape index: {}]
  %s10 = inlined_call_operand.vmem [shape: f32[1,5], index: 10, kind: input, shape index: {}]
  %s11 = inlined_call_operand.vmem [shape: f32[5,8], index: 11, kind: input, shape index: {}]
  %s12 = inlined_call_operand.vmem [shape: f32[1,8], index: 12, kind: input, shape index: {}]
  %s13 = inlined_call_operand.hbm [shape: f32[8,8], index: 13, kind: output, shape index: {}]
  %s14 = sld [smem:[#allocation0]]
  $region62: #{tpu_custom_call.1} parent=0
    _
  %s16 = ssub.s32 1, %s14
  %s17 = scalar_select 0, %s16, %s14
  $region1: #{tpu_custom_call.1} parent=0
    #allocation2 [shape = 'u8[4096]{0}', space=vmem, size = 0x1000, scoped, tag = 'output window, operand 0, single buffered']
    #allocation3 [shape = 's32[1]{0}', space=sflag, size = 0x4, scoped, tag = 'scoped memory for tpu_custom_call.1']
    %18 = vsyncpa [#allocation3], 0
    // Predicated region
    $region2: #{tpu_custom_call.1} parent=1 // pred_check
      _
    $region3: #{tpu_custom_call.1} parent=1 // pred_check_branch
      %20 = sbr.rel (0) target = $region5
    $region4: #{tpu_custom_call.1} parent=1 // pred_region
      _
    $region5: #{tpu_custom_call.1} parent=1 // pred_fallthru
      _
    // Predicated region
    $region6: #{tpu_custom_call.1} parent=1 // pred_check
      _
    $region7: #{tpu_custom_call.1} parent=1 // pred_check_branch
      %22 = sbr.rel (0) target = $region9
    $region8: #{tpu_custom_call.1} parent=1 // pred_region
      _
    $region9: #{tpu_custom_call.1} parent=1 // pred_fallthru
      _
    // Predicated region
    $region10: #{tpu_custom_call.1} parent=1 // pred_check
      _
    $region11: #{tpu_custom_call.1} parent=1 // pred_check_branch
      %24 = sbr.rel (0) target = $region13
    $region12: #{tpu_custom_call.1} parent=1 // pred_region
      _
    $region13: #{tpu_custom_call.1} parent=1 // pred_fallthru
      _
    // Predicated region
    $region14: #{tpu_custom_call.1} parent=1 // pred_check
      _
    $region15: #{tpu_custom_call.1} parent=1 // pred_check_branch
      %26 = sbr.rel (0) target = $region17
    $region16: #{tpu_custom_call.1} parent=1 // pred_region
      _
    $region17: #{tpu_custom_call.1} parent=1 // pred_fallthru
      _
    // Predicated region
    $region18: #{tpu_custom_call.1} parent=1 // pred_check
      _
    $region19: #{tpu_custom_call.1} parent=1 // pred_check_branch
      %28 = sbr.rel (0) target = $region21
    $region20: #{tpu_custom_call.1} parent=1 // pred_region
      _
    $region21: #{tpu_custom_call.1} parent=1 // pred_fallthru
      _
    // Predicated region
    $region22: #{tpu_custom_call.1} parent=1 // pred_check
      _
    $region23: #{tpu_custom_call.1} parent=1 // pred_check_branch
      %30 = sbr.rel (0) target = $region25
    $region24: #{tpu_custom_call.1} parent=1 // pred_region
      _
    $region25: #{tpu_custom_call.1} parent=1 // pred_fallthru
      _
    // Predicated region
    $region26: #{tpu_custom_call.1} parent=1 // pred_check
      _
    $region27: #{tpu_custom_call.1} parent=1 // pred_check_branch
      %32 = sbr.rel (0) target = $region29
    $region28: #{tpu_custom_call.1} parent=1 // pred_region
      _
    $region29: #{tpu_custom_call.1} parent=1 // pred_fallthru
      _
    // Predicated region
    $region30: #{tpu_custom_call.1} parent=1 // pred_check
      _
    $region31: #{tpu_custom_call.1} parent=1 // pred_check_branch
      %34 = sbr.rel (0) target = $region33
    $region32: #{tpu_custom_call.1} parent=1 // pred_region
      _
    $region33: #{tpu_custom_call.1} parent=1 // pred_fallthru
      _
    // Predicated region
    $region34: #{tpu_custom_call.1} parent=1 // pred_check
      _
    $region35: #{tpu_custom_call.1} parent=1 // pred_check_branch
      %36 = sbr.rel (0) target = $region37
    $region36: #{tpu_custom_call.1} parent=1 // pred_region
      _
    $region37: #{tpu_custom_call.1} parent=1 // pred_fallthru
      _
    // Predicated region
    $region38: #{tpu_custom_call.1} parent=1 // pred_check
      _
    $region39: #{tpu_custom_call.1} parent=1 // pred_check_branch
      %38 = sbr.rel (0) target = $region41
    $region40: #{tpu_custom_call.1} parent=1 // pred_region
      _
    $region41: #{tpu_custom_call.1} parent=1 // pred_fallthru
      _
    // Predicated region
    $region42: #{tpu_custom_call.1} parent=1 // pred_check
      _
    $region43: #{tpu_custom_call.1} parent=1 // pred_check_branch
      %40 = sbr.rel (0) target = $region45
    $region44: #{tpu_custom_call.1} parent=1 // pred_region
      _
    $region45: #{tpu_custom_call.1} parent=1 // pred_fallthru
      _
    // Predicated region
    $region46: #{tpu_custom_call.1} parent=1 // pred_check
      _
    $region47: #{tpu_custom_call.1} parent=1 // pred_check_branch
      %42 = sbr.rel (0) target = $region49
    $region48: #{tpu_custom_call.1} parent=1 // pred_region
      _
    $region49: #{tpu_custom_call.1} parent=1 // pred_fallthru
      _
    // Predicated region
    $region50: #{tpu_custom_call.1} parent=1 // pred_check
      _
    $region51: #{tpu_custom_call.1} parent=1 // pred_check_branch
      %44 = sbr.rel (0) target = $region53
    $region52: #{tpu_custom_call.1} parent=1 // pred_region
      _
    $region53: #{tpu_custom_call.1} parent=1 // pred_fallthru
      _
    %v45 = vld [vmem:[%s0] sm:$0xff]
    %v46 = vld [vmem:[%s1] sm:$0xff]
    %v47 = vmul.f32 %v45, %v46
    %v48 = vld [vmem:[%s2] sm:$0xff]
    %v49 = vld [vmem:[%s2 + $0x8] sm:$0xff]
    %v50 = vld [vmem:[%s2 + $0x10] sm:$0xff]
    %v51 = vld [vmem:[%s2 + $0x18] sm:$0xff]
    %v52 = vld [vmem:[%s3] sm:$0x1]
    %v54 = vlaneseq
    %v55 = vshrl.u32 %v54, 7
    %v56 = vsub.s32 0, %v55
    %v57 = vrot.slane %v52, %v56
    %vm59 = vcmask 261120
    %v61 = vsel %vm59, %v47, 0
    %63 = vmatprep.subr.mxu0 0.0
    %64 = vmatpush1.msra.mxu0 %v48
    %65 = vmatprep.subr.mxu0 0.0
    %66 = vmatpush1.msra.mxu0 %v49
    %67 = vmatprep.subr.mxu0 0.0
    %68 = vmatpush1.msra.mxu0 %v50
    %69 = vmatprep.subr.mxu0 0.0
    %70 = vmatpush1.msra.mxu0 %v51
    %71 = vmatprep.subr.mxu0 0.0
    %72 = vmatpush1.msra.mxu0 0.0
    %73 = vmatprep.subr.mxu0 0.0
    %74 = vmatpush1.msra.mxu0 0.0
    %75 = vmatprep.subr.mxu0 0.0
    %76 = vmatpush1.msra.mxu0 0.0
    %77 = vmatprep.subr.mxu0 0.0
    %78 = vmatpush1.msra.mxu0 0.0
    %79 = vmatprep.subr.mxu0 0.0
    %80 = vmatpush1.msra.mxu0 0.0
    %81 = vmatprep.subr.mxu0 0.0
    %82 = vmatpush1.msra.mxu0 0.0
    %83 = vmatprep.subr.mxu0 0.0
    %84 = vmatpush1.msra.mxu0 0.0
    %85 = vmatprep.subr.mxu0 0.0
    %86 = vmatpush1.msra.mxu0 0.0
    %87 = vmatprep.subr.mxu0 0.0
    %88 = vmatpush1.msra.mxu0 0.0
    %89 = vmatprep.subr.mxu0 0.0
    %90 = vmatpush1.msra.mxu0 0.0
    %91 = vmatprep.subr.mxu0 0.0
    %92 = vmatpush1.msra.mxu0 0.0
    %93 = vmatprep.subr.mxu0 0.0
    %94 = vmatpush1.msra.mxu0 0.0
    %95 = vmatprep.subr.mxu0 0.0
    %96 = vmatpush1.msra.mxu0 0.0
    %97 = vmatprep.subr.mxu0 0.0
    %98 = vmatpush1.msra.mxu0 0.0
    %99 = vmatprep.subr.mxu0 0.0
    %100 = vmatpush1.msra.mxu0 0.0
    %101 = vmatprep.subr.mxu0 0.0
    %102 = vmatpush1.msra.mxu0 0.0
    %103 = vmatprep.subr.mxu0 0.0
    %104 = vmatpush1.msra.mxu0 0.0
    %105 = vmatprep.subr.mxu0 0.0
    %106 = vmatpush1.msra.mxu0 0.0
    %107 = vmatprep.subr.mxu0 0.0
    %108 = vmatpush1.msra.mxu0 0.0
    %109 = vmatprep.subr.mxu0 0.0
    %110 = vmatpush1.msra.mxu0 0.0
    %111 = vmatprep.subr.mxu0 0.0
    %112 = vmatpush1.msra.mxu0 0.0
    %113 = vmatprep.subr.mxu0 0.0
    %114 = vmatpush1.msra.mxu0 0.0
    %115 = vmatprep.subr.mxu0 0.0
    %116 = vmatpush1.msra.mxu0 0.0
    %117 = vmatprep.subr.mxu0 0.0
    %118 = vmatpush1.msra.mxu0 0.0
    %119 = vmatprep.subr.mxu0 0.0
    %120 = vmatpush1.msra.mxu0 0.0
    %121 = vmatprep.subr.mxu0 0.0
    %122 = vmatpush1.msra.mxu0 0.0
    %123 = vmatprep.subr.mxu0 0.0
    %124 = vmatpush1.msra.mxu0 0.0
    %125 = vmatprep.subr.mxu0 0.0
    %126 = vmatpush1.msra.mxu0 0.0
    %127 = vmatprep.mubr.f32.mxu0 0.0
    %128 = vmatmul.mubr.f32.gmra.mrb[0].mxu0 %v61
    %v129 = vpop.f32.mrb[0].mxu0
    %v130 = vadd.f32 %v57, %v129
    %v131 = vpop.f32.mrb[0].mxu0
    %132 = vdwg.mxu0
    %v133 = vmax.f32 %v130, 0.0
    %v134 = vld [vmem:[%s4] sm:$0xff]
    %v135 = vmul.f32 %v133, %v134
    %v136 = vld [vmem:[%s5] sm:$0xff]
    %v137 = vld [vmem:[%s5 + $0x8] sm:$0xff]
    %v138 = vld [vmem:[%s5 + $0x10] sm:$0xff]
    %v139 = vld [vmem:[%s5 + $0x18] sm:$0xff]
    %v140 = vld [vmem:[%s5 + $0x20] sm:$0xff]
    %v141 = vld [vmem:[%s5 + $0x28] sm:$0xff]
    %v142 = vld [vmem:[%s5 + $0x30] sm:$0x3]
    %v143 = vld [vmem:[%s6] sm:$0x1]
    %v145 = vlaneseq
    %v146 = vshrl.u32 %v145, 7
    %v147 = vsub.s32 0, %v146
    %v148 = vrot.slane %v143, %v147
    %vm150 = vcmask 408576
    %v152 = vsel %vm150, %v135, 0
    %vm154 = vcmask 1041408
    %v156 = vsel %vm154, %v142, 0
    %158 = vmatprep.subr.mxu0 0.0
    %159 = vmatpush1.msra.mxu0 %v136
    %160 = vmatprep.subr.mxu0 0.0
    %161 = vmatpush1.msra.mxu0 %v137
    %162 = vmatprep.subr.mxu0 0.0
    %163 = vmatpush1.msra.mxu0 %v138
    %164 = vmatprep.subr.mxu0 0.0
    %165 = vmatpush1.msra.mxu0 %v139
    %166 = vmatprep.subr.mxu0 0.0
    %167 = vmatpush1.msra.mxu0 %v140
    %168 = vmatprep.subr.mxu0 0.0
    %169 = vmatpush1.msra.mxu0 %v141
    %170 = vmatprep.subr.mxu0 0.0
    %171 = vmatpush1.msra.mxu0 %v156
    %172 = vmatprep.subr.mxu0 0.0
    %173 = vmatpush1.msra.mxu0 0.0
    %174 = vmatprep.subr.mxu0 0.0
    %175 = vmatpush1.msra.mxu0 0.0
    %176 = vmatprep.subr.mxu0 0.0
    %177 = vmatpush1.msra.mxu0 0.0
    %178 = vmatprep.subr.mxu0 0.0
    %179 = vmatpush1.msra.mxu0 0.0
    %180 = vmatprep.subr.mxu0 0.0
    %181 = vmatpush1.msra.mxu0 0.0
    %182 = vmatprep.subr.mxu0 0.0
    %183 = vmatpush1.msra.mxu0 0.0
    %184 = vmatprep.subr.mxu0 0.0
    %185 = vmatpush1.msra.mxu0 0.0
    %186 = vmatprep.subr.mxu0 0.0
    %187 = vmatpush1.msra.mxu0 0.0
    %188 = vmatprep.subr.mxu0 0.0
    %189 = vmatpush1.msra.mxu0 0.0
    %190 = vmatprep.subr.mxu0 0.0
    %191 = vmatpush1.msra.mxu0 0.0
    %192 = vmatprep.subr.mxu0 0.0
    %193 = vmatpush1.msra.mxu0 0.0
    %194 = vmatprep.subr.mxu0 0.0
    %195 = vmatpush1.msra.mxu0 0.0
    %196 = vmatprep.subr.mxu0 0.0
    %197 = vmatpush1.msra.mxu0 0.0
    %198 = vmatprep.subr.mxu0 0.0
    %199 = vmatpush1.msra.mxu0 0.0
    %200 = vmatprep.subr.mxu0 0.0
    %201 = vmatpush1.msra.mxu0 0.0
    %202 = vmatprep.subr.mxu0 0.0
    %203 = vmatpush1.msra.mxu0 0.0
    %204 = vmatprep.subr.mxu0 0.0
    %205 = vmatpush1.msra.mxu0 0.0
    %206 = vmatprep.subr.mxu0 0.0
    %207 = vmatpush1.msra.mxu0 0.0
    %208 = vmatprep.subr.mxu0 0.0
    %209 = vmatpush1.msra.mxu0 0.0
    %210 = vmatprep.subr.mxu0 0.0
    %211 = vmatpush1.msra.mxu0 0.0
    %212 = vmatprep.subr.mxu0 0.0
    %213 = vmatpush1.msra.mxu0 0.0
    %214 = vmatprep.subr.mxu0 0.0
    %215 = vmatpush1.msra.mxu0 0.0
    %216 = vmatprep.subr.mxu0 0.0
    %217 = vmatpush1.msra.mxu0 0.0
    %218 = vmatprep.subr.mxu0 0.0
    %219 = vmatpush1.msra.mxu0 0.0
    %220 = vmatprep.subr.mxu0 0.0
    %221 = vmatpush1.msra.mxu0 0.0
    %222 = vmatprep.mubr.f32.mxu0 0.0
    %223 = vmatmul.mubr.f32.gmra.mrb[0].mxu0 %v152
    %v224 = vpop.f32.mrb[0].mxu0
    %v225 = vadd.f32 %v148, %v224
    %v226 = vpop.f32.mrb[0].mxu0
    %227 = vdwg.mxu0
    %v228 = vmax.f32 %v225, 0.0
    %v229 = vld [vmem:[%s7] sm:$0xff]
    %v230 = vld [vmem:[%s7 + $0x8] sm:$0xff]
    %v231 = vld [vmem:[%s7 + $0x10] sm:$0xf]
    %v232 = vld [vmem:[%s8] sm:$0x1]
    %v234 = vlaneseq
    %v235 = vshrl.u32 %v234, 7
    %v236 = vsub.s32 0, %v235
    %v237 = vrot.slane %v232, %v236
    %vm239 = vcmask 162816
    %v241 = vsel %vm239, %v228, 0
    %vm243 = vcmask 1043456
    %v245 = vsel %vm243, %v231, 0
    %247 = vmatprep.subr.mxu0 0.0
    %248 = vmatpush1.msra.mxu0 %v229
    %249 = vmatprep.subr.mxu0 0.0
    %250 = vmatpush1.msra.mxu0 %v230
    %251 = vmatprep.subr.mxu0 0.0
    %252 = vmatpush1.msra.mxu0 %v245
    %253 = vmatprep.subr.mxu0 0.0
    %254 = vmatpush1.msra.mxu0 0.0
    %255 = vmatprep.subr.mxu0 0.0
    %256 = vmatpush1.msra.mxu0 0.0
    %257 = vmatprep.subr.mxu0 0.0
    %258 = vmatpush1.msra.mxu0 0.0
    %259 = vmatprep.subr.mxu0 0.0
    %260 = vmatpush1.msra.mxu0 0.0
    %261 = vmatprep.subr.mxu0 0.0
    %262 = vmatpush1.msra.mxu0 0.0
    %263 = vmatprep.subr.mxu0 0.0
    %264 = vmatpush1.msra.mxu0 0.0
    %265 = vmatprep.subr.mxu0 0.0
    %266 = vmatpush1.msra.mxu0 0.0
    %267 = vmatprep.subr.mxu0 0.0
    %268 = vmatpush1.msra.mxu0 0.0
    %269 = vmatprep.subr.mxu0 0.0
    %270 = vmatpush1.msra.mxu0 0.0
    %271 = vmatprep.subr.mxu0 0.0
    %272 = vmatpush1.msra.mxu0 0.0
    %273 = vmatprep.subr.mxu0 0.0
    %274 = vmatpush1.msra.mxu0 0.0
    %275 = vmatprep.subr.mxu0 0.0
    %276 = vmatpush1.msra.mxu0 0.0
    %277 = vmatprep.subr.mxu0 0.0
    %278 = vmatpush1.msra.mxu0 0.0
    %279 = vmatprep.subr.mxu0 0.0
    %280 = vmatpush1.msra.mxu0 0.0
    %281 = vmatprep.subr.mxu0 0.0
    %282 = vmatpush1.msra.mxu0 0.0
    %283 = vmatprep.subr.mxu0 0.0
    %284 = vmatpush1.msra.mxu0 0.0
    %285 = vmatprep.subr.mxu0 0.0
    %286 = vmatpush1.msra.mxu0 0.0
    %287 = vmatprep.subr.mxu0 0.0
    %288 = vmatpush1.msra.mxu0 0.0
    %289 = vmatprep.subr.mxu0 0.0
    %290 = vmatpush1.msra.mxu0 0.0
    %291 = vmatprep.subr.mxu0 0.0
    %292 = vmatpush1.msra.mxu0 0.0
    %293 = vmatprep.subr.mxu0 0.0
    %294 = vmatpush1.msra.mxu0 0.0
    %295 = vmatprep.subr.mxu0 0.0
    %296 = vmatpush1.msra.mxu0 0.0
    %297 = vmatprep.subr.mxu0 0.0
    %298 = vmatpush1.msra.mxu0 0.0
    %299 = vmatprep.subr.mxu0 0.0
    %300 = vmatpush1.msra.mxu0 0.0
    %301 = vmatprep.subr.mxu0 0.0
    %302 = vmatpush1.msra.mxu0 0.0
    %303 = vmatprep.subr.mxu0 0.0
    %304 = vmatpush1.msra.mxu0 0.0
    %305 = vmatprep.subr.mxu0 0.0
    %306 = vmatpush1.msra.mxu0 0.0
    %307 = vmatprep.subr.mxu0 0.0
    %308 = vmatpush1.msra.mxu0 0.0
    %309 = vmatprep.subr.mxu0 0.0
    %310 = vmatpush1.msra.mxu0 0.0
    %311 = vmatprep.mubr.f32.mxu0 0.0
    %312 = vmatmul.mubr.f32.gmra.mrb[0].mxu0 %v241
    %v313 = vpop.f32.mrb[0].mxu0
    %v314 = vadd.f32 %v237, %v313
    %v315 = vpop.f32.mrb[0].mxu0
    %316 = vdwg.mxu0
    %v317 = vmax.f32 %v314, 0.0
    %v318 = vld [vmem:[%s9] sm:$0xff]
    %v319 = vld [vmem:[%s9 + $0x8] sm:$0x3]
    %v320 = vld [vmem:[%s10] sm:$0x1]
    %v322 = vlaneseq
    %v323 = vshrl.u32 %v322, 7
    %v324 = vsub.s32 0, %v323
    %v325 = vrot.slane %v320, %v324
    %vm327 = vcmask 80896
    %v329 = vsel %vm327, %v317, 0
    %v332 = vsel %vm154, %v319, 0
    %334 = vmatprep.subr.mxu0 0.0
    %335 = vmatpush1.msra.mxu0 %v318
    %336 = vmatprep.subr.mxu0 0.0
    %337 = vmatpush1.msra.mxu0 %v332
    %338 = vmatprep.subr.mxu0 0.0
    %339 = vmatpush1.msra.mxu0 0.0
    %340 = vmatprep.subr.mxu0 0.0
    %341 = vmatpush1.msra.mxu0 0.0
    %342 = vmatprep.subr.mxu0 0.0
    %343 = vmatpush1.msra.mxu0 0.0
    %344 = vmatprep.subr.mxu0 0.0
    %345 = vmatpush1.msra.mxu0 0.0
    %346 = vmatprep.subr.mxu0 0.0
    %347 = vmatpush1.msra.mxu0 0.0
    %348 = vmatprep.subr.mxu0 0.0
    %349 = vmatpush1.msra.mxu0 0.0
    %350 = vmatprep.subr.mxu0 0.0
    %351 = vmatpush1.msra.mxu0 0.0
    %352 = vmatprep.subr.mxu0 0.0
    %353 = vmatpush1.msra.mxu0 0.0
    %354 = vmatprep.subr.mxu0 0.0
    %355 = vmatpush1.msra.mxu0 0.0
    %356 = vmatprep.subr.mxu0 0.0
    %357 = vmatpush1.msra.mxu0 0.0
    %358 = vmatprep.subr.mxu0 0.0
    %359 = vmatpush1.msra.mxu0 0.0
    %360 = vmatprep.subr.mxu0 0.0
    %361 = vmatpush1.msra.mxu0 0.0
    %362 = vmatprep.subr.mxu0 0.0
    %363 = vmatpush1.msra.mxu0 0.0
    %364 = vmatprep.subr.mxu0 0.0
    %365 = vmatpush1.msra.mxu0 0.0
    %366 = vmatprep.subr.mxu0 0.0
    %367 = vmatpush1.msra.mxu0 0.0
    %368 = vmatprep.subr.mxu0 0.0
    %369 = vmatpush1.msra.mxu0 0.0
    %370 = vmatprep.subr.mxu0 0.0
    %371 = vmatpush1.msra.mxu0 0.0
    %372 = vmatprep.subr.mxu0 0.0
    %373 = vmatpush1.msra.mxu0 0.0
    %374 = vmatprep.subr.mxu0 0.0
    %375 = vmatpush1.msra.mxu0 0.0
    %376 = vmatprep.subr.mxu0 0.0
    %377 = vmatpush1.msra.mxu0 0.0
    %378 = vmatprep.subr.mxu0 0.0
    %379 = vmatpush1.msra.mxu0 0.0
    %380 = vmatprep.subr.mxu0 0.0
    %381 = vmatpush1.msra.mxu0 0.0
    %382 = vmatprep.subr.mxu0 0.0
    %383 = vmatpush1.msra.mxu0 0.0
    %384 = vmatprep.subr.mxu0 0.0
    %385 = vmatpush1.msra.mxu0 0.0
    %386 = vmatprep.subr.mxu0 0.0
    %387 = vmatpush1.msra.mxu0 0.0
    %388 = vmatprep.subr.mxu0 0.0
    %389 = vmatpush1.msra.mxu0 0.0
    %390 = vmatprep.subr.mxu0 0.0
    %391 = vmatpush1.msra.mxu0 0.0
    %392 = vmatprep.subr.mxu0 0.0
    %393 = vmatpush1.msra.mxu0 0.0
    %394 = vmatprep.subr.mxu0 0.0
    %395 = vmatpush1.msra.mxu0 0.0
    %396 = vmatprep.subr.mxu0 0.0
    %397 = vmatpush1.msra.mxu0 0.0
    %398 = vmatprep.mubr.f32.mxu0 0.0
    %399 = vmatmul.mubr.f32.gmra.mrb[0].mxu0 %v329
    %v400 = vpop.f32.mrb[0].mxu0
    %v401 = vadd.f32 %v325, %v400
    %v402 = vpop.f32.mrb[0].mxu0
    %403 = vdwg.mxu0
    %v404 = vmax.f32 %v401, 0.0
    %v405 = vld [vmem:[%s11] sm:$0x1f]
    %v406 = vld [vmem:[%s12] sm:$0x1]
    %v408 = vlaneseq
    %v409 = vshrl.u32 %v408, 7
    %v410 = vsub.s32 0, %v409
    %v411 = vrot.slane %v406, %v410
    %vm413 = vcmask 39936
    %v415 = vsel %vm413, %v404, 0
    %vm417 = vcmask 1044480
    %v419 = vsel %vm417, %v405, 0
    %421 = vmatprep.subr.mxu0 0.0
    %422 = vmatpush1.msra.mxu0 %v419
    %423 = vmatprep.subr.mxu0 0.0
    %424 = vmatpush1.msra.mxu0 0.0
    %425 = vmatprep.subr.mxu0 0.0
    %426 = vmatpush1.msra.mxu0 0.0
    %427 = vmatprep.subr.mxu0 0.0
    %428 = vmatpush1.msra.mxu0 0.0
    %429 = vmatprep.subr.mxu0 0.0
    %430 = vmatpush1.msra.mxu0 0.0
    %431 = vmatprep.subr.mxu0 0.0
    %432 = vmatpush1.msra.mxu0 0.0
    %433 = vmatprep.subr.mxu0 0.0
    %434 = vmatpush1.msra.mxu0 0.0
    %435 = vmatprep.subr.mxu0 0.0
    %436 = vmatpush1.msra.mxu0 0.0
    %437 = vmatprep.subr.mxu0 0.0
    %438 = vmatpush1.msra.mxu0 0.0
    %439 = vmatprep.subr.mxu0 0.0
    %440 = vmatpush1.msra.mxu0 0.0
    %441 = vmatprep.subr.mxu0 0.0
    %442 = vmatpush1.msra.mxu0 0.0
    %443 = vmatprep.subr.mxu0 0.0
    %444 = vmatpush1.msra.mxu0 0.0
    %445 = vmatprep.subr.mxu0 0.0
    %446 = vmatpush1.msra.mxu0 0.0
    %447 = vmatprep.subr.mxu0 0.0
    %448 = vmatpush1.msra.mxu0 0.0
    %449 = vmatprep.subr.mxu0 0.0
    %450 = vmatpush1.msra.mxu0 0.0
    %451 = vmatprep.subr.mxu0 0.0
    %452 = vmatpush1.msra.mxu0 0.0
    %453 = vmatprep.subr.mxu0 0.0
    %454 = vmatpush1.msra.mxu0 0.0
    %455 = vmatprep.subr.mxu0 0.0
    %456 = vmatpush1.msra.mxu0 0.0
    %457 = vmatprep.subr.mxu0 0.0
    %458 = vmatpush1.msra.mxu0 0.0
    %459 = vmatprep.subr.mxu0 0.0
    %460 = vmatpush1.msra.mxu0 0.0
    %461 = vmatprep.subr.mxu0 0.0
    %462 = vmatpush1.msra.mxu0 0.0
    %463 = vmatprep.subr.mxu0 0.0
    %464 = vmatpush1.msra.mxu0 0.0
    %465 = vmatprep.subr.mxu0 0.0
    %466 = vmatpush1.msra.mxu0 0.0
    %467 = vmatprep.subr.mxu0 0.0
    %468 = vmatpush1.msra.mxu0 0.0
    %469 = vmatprep.subr.mxu0 0.0
    %470 = vmatpush1.msra.mxu0 0.0
    %471 = vmatprep.subr.mxu0 0.0
    %472 = vmatpush1.msra.mxu0 0.0
    %473 = vmatprep.subr.mxu0 0.0
    %474 = vmatpush1.msra.mxu0 0.0
    %475 = vmatprep.subr.mxu0 0.0
    %476 = vmatpush1.msra.mxu0 0.0
    %477 = vmatprep.subr.mxu0 0.0
    %478 = vmatpush1.msra.mxu0 0.0
    %479 = vmatprep.subr.mxu0 0.0
    %480 = vmatpush1.msra.mxu0 0.0
    %481 = vmatprep.subr.mxu0 0.0
    %482 = vmatpush1.msra.mxu0 0.0
    %483 = vmatprep.subr.mxu0 0.0
    %484 = vmatpush1.msra.mxu0 0.0
    %485 = vmatprep.mubr.f32.mxu0 0.0
    %486 = vmatmul.mubr.f32.gmra.mrb[0].mxu0 %v415
    %v487 = vpop.f32.mrb[0].mxu0
    %v488 = vadd.f32 %v411, %v487
    %v489 = vpop.f32.mrb[0].mxu0
    %490 = vdwg.mxu0
    %vm491 = vcmask 64512
    %492 = vst.msk [vmem:[#allocation2] sm:$0xff] %vm491, %v488
    // Predicated region
    $region54: #{tpu_custom_call.1} parent=1 // pred_check
      _
    $region55: #{tpu_custom_call.1} parent=1 // pred_check_branch
      %494 = sbr.rel (0) target = $region57
    $region56: #{tpu_custom_call.1} parent=1 // pred_region
      %s496 = ssub.s32 128, 128
      %497 = vsyncadd [#allocation3], %s496
      %s499 = sshll.u32 [#allocation2], 4
      %s500 = int_to_ptr.vmem [resolvable:$true] %s499
      %502 = dma.vmem_to_hbm [thread:$0]  %s500, 128, %s13, [#allocation3]
    $region57: #{tpu_custom_call.1} parent=1 // pred_fallthru
      _
    // Predicated region
    $region58: #{tpu_custom_call.1} parent=1 // pred_check
      _
    $region59: #{tpu_custom_call.1} parent=1 // pred_check_branch
      %504 = sbr.rel (0) target = $region61
    $region60: #{tpu_custom_call.1} parent=1 // pred_region
      %505 = dma.done [#allocation3], 128
    $region61: #{tpu_custom_call.1} parent=1 // pred_fallthru
      _
    %506 = vsyncpa [#allocation3], 1

</llo_original>
